<compile_context>
chip_gen: v7x
topology: tpu7x:2x2x1
jax: 0.10.0
libtpu: 0.0.40
codegen_flags: <defaults>
</compile_context>

<pallas_src>
import functools

import jax
import jax.numpy as jnp
from jax import lax
from jax.experimental import pallas as pl
from jax.experimental.pallas import tpu as pltpu

_LANES = 128
_SUBLANES = 8
_CHUNK_ROWS = 512                       # in-kernel sub-chunk: bounds f32 temps to ~1 MiB
_MIN_KERNEL_ELEMS = _SUBLANES * _LANES  # below this, plain JAX is cheaper than a launch


def _elementwise_dist_sum(x, y, *, log, log_eps, log_fac, squared):
    """Pure-JAX distance-sum for the ragged tail / tiny-input fallback."""
    x = x.astype(jnp.float32)
    y = y.astype(jnp.float32)
    if log:
        x = jnp.log(log_fac * x + log_eps)
        y = jnp.log(log_fac * y + log_eps)
    d = x - y
    d = d * d if squared else jnp.abs(d)
    return jnp.sum(d, dtype=jnp.float32)


def _tree_partial_sum(d, chunk_rows):
    """Reduce a (chunk_rows, 128) f32 tile to an (8, 128) partial sum.

    Two-stage reduce (K parallel chains) keeps the dependent f32-add depth small;
    every (8, 128) slab is a whole vreg, so this is VPU-only (no XLU).
    """
    if chunk_rows % (8 * _SUBLANES) == 0:
        return d.reshape(-1, 8, _SUBLANES, _LANES).sum(axis=0).sum(axis=0)
    return d.reshape(-1, _SUBLANES, _LANES).sum(axis=0)


def _mag_loss_block_kernel(x_ref, y_ref, out_ref, *, log, log_eps, log_fac,
                           squared, block_rows, chunk_rows, total_rows,
                           needs_mask):
    """One grid step: reduce a (block_rows, 128) tile pair to an (8, 128) partial sum."""
    num_chunks = block_rows // chunk_rows                     # static
    if needs_mask:
        b = pl.program_id(0)
        rows_valid = jnp.minimum(block_rows, total_rows - b * block_rows)

    def chunk_body(c, acc):
        base = pl.multiple_of(c * chunk_rows, chunk_rows)
        x = x_ref[pl.ds(base, chunk_rows), :].astype(jnp.float32)
        y = y_ref[pl.ds(base, chunk_rows), :].astype(jnp.float32)
        if log:
            x = jnp.log(log_fac * x + log_eps)
            y = jnp.log(log_fac * y + log_eps)
        d = x - y
        d = d * d if squared else jnp.abs(d)
        if needs_mask:
            # Mask d (not the inputs): out-of-range rows contribute exactly 0 even if
            # the unspecified padding produced NaN/Inf through the log path.
            row_ids = base + lax.broadcasted_iota(jnp.int32, (chunk_rows, _LANES), 0)
            d = jnp.where(row_ids < rows_valid, d, 0.0)
        return acc + _tree_partial_sum(d, chunk_rows)

    acc0 = jnp.zeros((_SUBLANES, _LANES), jnp.float32)
    acc = lax.fori_loop(0, num_chunks, chunk_body, acc0,
                        unroll=min(num_chunks, 4))
    out_ref[0] = acc


def _default_block_rows():
    """~4 MiB/input/buffer on v6e/v7x, ~2 MiB elsewhere (v5e scoped-VMEM default)."""
    try:
        kind = jax.devices()[0].device_kind.lower()
    except Exception:
        return 4096
    if ("v6" in kind) or ("v7" in kind) or ("6e" in kind) or ("7x" in kind):
        return 8192
    return 4096


def _choose_block(rows, requested):
    """Pick (block_rows, chunk_rows): big DMA blocks, >= 4 grid steps when possible."""
    br = int(requested) if requested is not None else _default_block_rows()
    # Guarantee >= 4 grid steps (>= 2 per TensorCore on megacore parts) whenever that
    # still leaves efficient >= _CHUNK_ROWS-row blocks.
    if rows >= 4 * _CHUNK_ROWS:
        br = min(br, -(-rows // 4))
    br = max(_SUBLANES, min(br, rows))
    if br >= _CHUNK_ROWS:
        br = -(-br // _CHUNK_ROWS) * _CHUNK_ROWS   # multiple of the sub-chunk size
        chunk_rows = _CHUNK_ROWS
    else:
        br = -(-br // _SUBLANES) * _SUBLANES       # sublane multiple
        chunk_rows = br
    return br, chunk_rows


def stft_magnitude_loss(x_mag, y_mag, *, log=True, log_eps=0.0, log_fac=1.0,
                        distance="L1", reduction="mean", block_rows=None):
    """Pallas implementation of STFTMagnitudeLoss.forward (mean/sum reductions)."""
    assert x_mag.shape == y_mag.shape, (x_mag.shape, y_mag.shape)

    if distance == "L1":
        squared = False
    elif distance == "L2":
        squared = True
    else:
        raise ValueError(f"Invalid distance: '{distance}'.")
    if reduction not in ("mean", "sum"):
        # TODO(synk): reduction='none' (elementwise output tensor) not implemented.
        raise NotImplementedError(f"reduction='{reduction}' not supported")

    log = bool(log)
    log_eps = float(log_eps)
    log_fac = float(log_fac)

    n = int(x_mag.size)
    xf = x_mag.reshape(-1)     # free (bitcast) reshape of a contiguous array
    yf = y_mag.reshape(-1)

    rows = n // _LANES
    rem = n - rows * _LANES

    total = jnp.float32(0.0)

    if rows * _LANES < _MIN_KERNEL_ELEMS:
        # Tiny input: not worth a kernel launch / (8,128) tiling.
        total = _elementwise_dist_sum(xf, yf, log=log, log_eps=log_eps,
                                      log_fac=log_fac, squared=squared)
    else:
        if rem:
            # Ragged (< 128 element) tail in plain JAX; only the small tail and the
            # lane-aligned prefix view are touched -- no padding of the bulk inputs.
            total = total + _elementwise_dist_sum(
                xf[rows * _LANES:], yf[rows * _LANES:],
                log=log, log_eps=log_eps, log_fac=log_fac, squared=squared)
            x2 = xf[: rows * _LANES].reshape(rows, _LANES)
            y2 = yf[: rows * _LANES].reshape(rows, _LANES)
        else:
            x2 = xf.reshape(rows, _LANES)   # free
            y2 = yf.reshape(rows, _LANES)

        br, chunk_rows = _choose_block(rows, block_rows)
        num_blocks = pl.cdiv(rows, br)
        needs_mask = (rows % br) != 0       # last block is partial -> mask in-kernel

        kernel = functools.partial(
            _mag_loss_block_kernel, log=log, log_eps=log_eps, log_fac=log_fac,
            squared=squared, block_rows=br, chunk_rows=chunk_rows,
            total_rows=rows, needs_mask=needs_mask)

        in_itemsize = jnp.dtype(x_mag.dtype).itemsize
        # Double-buffered input DMA slabs + headroom for sub-chunk temps / outputs.
        vmem_limit = int(2 * 2 * br * _LANES * in_itemsize + (16 << 20))

        partials = pl.pallas_call(
            kernel,
            out_shape=jax.ShapeDtypeStruct((num_blocks, _SUBLANES, _LANES),
                                           jnp.float32),
            grid_spec=pltpu.PrefetchScalarGridSpec(
                num_scalar_prefetch=0,
                grid=(num_blocks,),
                in_specs=[
                    pl.BlockSpec((br, _LANES), lambda b: (b, 0)),
                    pl.BlockSpec((br, _LANES), lambda b: (b, 0)),
                ],
                out_specs=pl.BlockSpec((1, _SUBLANES, _LANES),
                                       lambda b: (b, 0, 0)),
            ),
            compiler_params=pltpu.CompilerParams(
                dimension_semantics=("parallel",),   # no cross-step state: megacore-safe
                vmem_limit_bytes=vmem_limit),
        )(x2, y2)

        total = total + jnp.sum(partials, dtype=jnp.float32)

    if reduction == "mean":
        return total / jnp.float32(n)
    return total


def _ref_loss(x_mag, y_mag, *, log=True, log_eps=0.0, log_fac=1.0,
              distance="L1", reduction="mean"):
    """Pure-JAX reference with identical semantics (for correctness checking)."""
    x = x_mag.astype(jnp.float32)
    y = y_mag.astype(jnp.float32)
    if log:
        x = jnp.log(log_fac * x + log_eps)
        y = jnp.log(log_fac * y + log_eps)
    d = (x - y) ** 2 if distance == "L2" else jnp.abs(x - y)
    return jnp.mean(d) if reduction == "mean" else jnp.sum(d)


if __name__ == "__main__":
    key = jax.random.PRNGKey(0)
    kx, ky, kz = jax.random.split(key, 3)

    # Magnitude-spectrogram-like inputs: batch=2, channels=4,
    # 65 frequency bins (n_fft=128 onesided), 32 frames. Magnitudes are positive.
    B, C, F, T = 2, 4, 65, 32
    x_mag = jax.random.uniform(kx, (B, C, F, T), dtype=jnp.float32,
                               minval=1e-3, maxval=2.0)
    y_mag = x_mag * jnp.exp(
        0.1 * jax.random.normal(ky, (B, C, F, T), dtype=jnp.float32))

    # Default config (log=True, L1, mean) -- matches STFTMagnitudeLoss defaults.
    loss = jax.block_until_ready(stft_magnitude_loss(x_mag, y_mag))
    ref = _ref_loss(x_mag, y_mag)
    assert jnp.allclose(loss, ref, rtol=1e-4, atol=1e-6), (loss, ref)

    # L2 distance with 'sum' reduction.
    loss2 = jax.block_until_ready(
        stft_magnitude_loss(x_mag, y_mag, distance="L2", reduction="sum"))
    ref2 = _ref_loss(x_mag, y_mag, distance="L2", reduction="sum")
    assert jnp.allclose(loss2, ref2, rtol=1e-4, atol=1e-4), (loss2, ref2)

    # Linear-magnitude (log=False) variant.
    loss3 = jax.block_until_ready(stft_magnitude_loss(x_mag, y_mag, log=False))
    ref3 = _ref_loss(x_mag, y_mag, log=False)
    assert jnp.allclose(loss3, ref3, rtol=1e-4, atol=1e-6), (loss3, ref3)

    # Odd, non-lane-aligned shape: exercises the in-kernel partial-block mask and
    # the plain-JAX < 128-element tail path (no padding/copies of the bulk input).
    B2, C2, F2, T2 = 2, 3, 63, 21
    x_odd = jax.random.uniform(kz, (B2, C2, F2, T2), dtype=jnp.float32,
                               minval=1e-3, maxval=2.0)
    y_odd = x_odd * 1.05
    loss4 = jax.block_until_ready(stft_magnitude_loss(x_odd, y_odd))
    ref4 = _ref_loss(x_odd, y_odd)
    assert jnp.allclose(loss4, ref4, rtol=1e-4, atol=1e-6), (loss4, ref4)

    print("KERNEL_OK")
</pallas_src>

<mosaic_0001>
module attributes {stable_mosaic.version = 11 : i64} {
  func.func @_mag_loss_block_kernel(%arg0: i32, %arg1: memref<136x128xf32, #tpu.memory_space<vmem>>, %arg2: memref<136x128xf32, #tpu.memory_space<vmem>>, %arg3: memref<1x8x128xf32, #tpu.memory_space<vmem>>) attributes {dimension_semantics = [#tpu.dimension_semantics<parallel>], iteration_bounds = array<i64: 1>, scalar_prefetch = 0 : i64, scratch_operands = 0 : i64, tpu.core_type = #tpu.core_type<tc>, window_params = [{transform_indices = @transform_0, window_bounds = array<i64: 136, 128>}, {transform_indices = @transform_1, window_bounds = array<i64: 136, 128>}, {transform_indices = @transform_2, window_bounds = array<i64: 1, 8, 128>}]} {
    %c136_i32 = arith.constant 136 : i32
    %0 = arith.muli %arg0, %c136_i32 : i32
    %c130_i32 = arith.constant 130 : i32
    %1 = arith.subi %c130_i32, %0 : i32
    %c136_i32_0 = arith.constant 136 : i32
    %2 = arith.minsi %c136_i32_0, %1 : i32
    %cst = arith.constant 0.000000e+00 : f32
    %3 = vector.broadcast %cst : f32 to vector<8x128xf32>
    %c0_i32 = arith.constant 0 : i32
    %c136_i32_1 = arith.constant 136 : i32
    %4 = arith.muli %c0_i32, %c136_i32_1 : i32
    %5 = tpu.assume_multiple %4, 136 : i32
    %6 = arith.index_cast %5 : i32 to index
    %c0 = arith.constant 0 : index
    %7 = vector.load %arg1[%6, %c0] : memref<136x128xf32, #tpu.memory_space<vmem>>, vector<136x128xf32>
    %8 = arith.index_cast %5 : i32 to index
    %c0_2 = arith.constant 0 : index
    %9 = vector.load %arg2[%8, %c0_2] : memref<136x128xf32, #tpu.memory_space<vmem>>, vector<136x128xf32>
    %cst_3 = arith.constant 1.000000e+00 : f32
    %10 = vector.broadcast %cst_3 : f32 to vector<136x128xf32>
    %11 = arith.mulf %10, %7 : vector<136x128xf32>
    %cst_4 = arith.constant 0.000000e+00 : f32
    %12 = vector.broadcast %cst_4 : f32 to vector<136x128xf32>
    %13 = arith.addf %11, %12 : vector<136x128xf32>
    %14 = math.log %13 : vector<136x128xf32>
    %cst_5 = arith.constant 1.000000e+00 : f32
    %15 = vector.broadcast %cst_5 : f32 to vector<136x128xf32>
    %16 = arith.mulf %15, %9 : vector<136x128xf32>
    %cst_6 = arith.constant 0.000000e+00 : f32
    %17 = vector.broadcast %cst_6 : f32 to vector<136x128xf32>
    %18 = arith.addf %16, %17 : vector<136x128xf32>
    %19 = math.log %18 : vector<136x128xf32>
    %20 = arith.subf %14, %19 : vector<136x128xf32>
    %21 = math.absf %20 : vector<136x128xf32>
    %22 = tpu.iota {dimensions = array<i32: 0>} : vector<136x128xi32>
    %23 = vector.broadcast %5 : i32 to vector<136x128xi32>
    %24 = arith.addi %23, %22 : vector<136x128xi32>
    %25 = vector.broadcast %2 : i32 to vector<136x128xi32>
    %26 = arith.cmpi slt, %24, %25 : vector<136x128xi32>
    %cst_7 = arith.constant 0.000000e+00 : f32
    %27 = vector.broadcast %cst_7 : f32 to vector<136x128xf32>
    %28 = arith.select %26, %21, %27 : vector<136x128xi1>, vector<136x128xf32>
    %29 = vector.shape_cast %28 : vector<136x128xf32> to vector<17x8x128xf32>
    %cst_8 = arith.constant dense<0.000000e+00> : vector<8x128xf32>
    %30 = vector.multi_reduction <add>, %29, %cst_8 [0] : vector<17x8x128xf32> to vector<8x128xf32>
    %31 = arith.addf %3, %30 : vector<8x128xf32>
    %c1_i32 = arith.constant 1 : i32
    %c0_9 = arith.constant 0 : index
    %c0_10 = arith.constant 0 : index
    %c0_11 = arith.constant 0 : index
    %32 = vector.load %arg3[%c0_9, %c0_10, %c0_11] : memref<1x8x128xf32, #tpu.memory_space<vmem>>, vector<1x8x128xf32>
    %33 = vector.shape_cast %32 : vector<1x8x128xf32> to vector<8x128xf32>
    %34 = vector.shape_cast %31 : vector<8x128xf32> to vector<1x8x128xf32>
    tpu.vector_store %arg3[%c0_9, %c0_10, %c0_11], %34 {strides = array<i32>} : memref<1x8x128xf32, #tpu.memory_space<vmem>>, vector<1x8x128xf32>,
    return
  }
  func.func @transform_0(%arg0: i32) -> (i32, i32) {
    %c0_i32 = arith.constant 0 : i32
    %c0_i32_0 = arith.constant 0 : i32
    return %arg0, %c0_i32 : i32, i32
  }
  func.func @transform_1(%arg0: i32) -> (i32, i32) {
    %c0_i32 = arith.constant 0 : i32
    %c0_i32_0 = arith.constant 0 : i32
    return %arg0, %c0_i32 : i32, i32
  }
  func.func @transform_2(%arg0: i32) -> (i32, i32, i32) {
    %c0_i32 = arith.constant 0 : i32
    %c0_i32_0 = arith.constant 0 : i32
    %c0_i32_1 = arith.constant 0 : i32
    return %arg0, %c0_i32, %c0_i32_0 : i32, i32, i32
  }
}

</mosaic_0001>

<llo_original>
// kernel: tpu_custom_call.1
$region0: #{tpu_custom_call.1}
  #allocation0 [shape = 'u32[]', space=smem, size = 0x4, offset = 0x4, fixed_abs, tag = 'smem constant byte address 0x4 - core index']
  #allocation1 [shape = 'u32[144,128]{1,0:T(1,128)}', space=vmem, size = 0x12000, scoped, tag = 'internal scratch']
  %s0 = inlined_call_operand.hbm [shape: f32[130,128], index: 0, kind: input, shape index: {}]
  %s1 = inlined_call_operand.hbm [shape: f32[130,128], index: 1, kind: input, shape index: {}]
  %s2 = inlined_call_operand.hbm [shape: f32[1,8,128], index: 2, kind: output, shape index: {}]
  %s3 = sld [smem:[#allocation0]]
  $region26: #{tpu_custom_call.1} parent=0
    _
  %s5 = ssub.s32 1, %s3
  %s6 = scalar_select 0, %s5, %s3
  $region1: #{tpu_custom_call.1} parent=0
    #allocation2 [shape = 'u8[69632]{0}', space=vmem, size = 0x11000, scoped, tag = 'input window, operand 0, single buffered']
    #allocation3 [shape = 's32[1]{0}', space=sflag, size = 0x4, scoped, tag = 'scoped memory for tpu_custom_call.1']
    #allocation4 [shape = 's32[1]{0}', space=sflag, size = 0x4, scoped, tag = 'scoped memory for tpu_custom_call.1']
    #allocation5 [shape = 'u8[69632]{0}', space=vmem, size = 0x11000, scoped, tag = 'input window, operand 1, single buffered']
    #allocation6 [shape = 's32[1]{0}', space=sflag, size = 0x4, scoped, tag = 'scoped memory for tpu_custom_call.1']
    #allocation7 [shape = 'u8[4096]{0}', space=vmem, size = 0x1000, scoped, tag = 'output window, operand 0, single buffered']
    %7 = vsyncpa [#allocation3], 0
    %8 = vsyncpa [#allocation6], 0
    %9 = vsyncpa [#allocation4], 0
    // Predicated region
    $region2: #{tpu_custom_call.1} parent=1 // pred_check
      _
    $region3: #{tpu_custom_call.1} parent=1 // pred_check_branch
      %11 = sbr.rel (0) target = $region5
    $region4: #{tpu_custom_call.1} parent=1 // pred_region
      %s13 = ssub.s32 2176, 2176
      %14 = vsyncadd [#allocation3], %s13
      %s15 = sshll.u32 [#allocation2], 4
      %s16 = int_to_ptr.vmem [resolvable:$true] %s15
      %21 = dma.hbm_to_vmem [thread:$0]  %s0, 2176, %s16, [#allocation3], 128, 128, 8
    $region5: #{tpu_custom_call.1} parent=1 // pred_fallthru
      _
    // Predicated region
    $region6: #{tpu_custom_call.1} parent=1 // pred_check
      _
    $region7: #{tpu_custom_call.1} parent=1 // pred_check_branch
      %23 = sbr.rel (0) target = $region9
    $region8: #{tpu_custom_call.1} parent=1 // pred_region
      %s25 = ssub.s32 2176, 2176
      %26 = vsyncadd [#allocation6], %s25
      %s27 = sshll.u32 [#allocation5], 4
      %s28 = int_to_ptr.vmem [resolvable:$true] %s27
      %33 = dma.hbm_to_vmem [thread:$0]  %s1, 2176, %s28, [#allocation6], 128, 128, 8
    $region9: #{tpu_custom_call.1} parent=1 // pred_fallthru
      _
    // Predicated region
    $region10: #{tpu_custom_call.1} parent=1 // pred_check
      _
    $region11: #{tpu_custom_call.1} parent=1 // pred_check_branch
      %35 = sbr.rel (0) target = $region13
    $region12: #{tpu_custom_call.1} parent=1 // pred_region
      %36 = dma.done [#allocation3], 2176
    $region13: #{tpu_custom_call.1} parent=1 // pred_fallthru
      _
    // Predicated region
    $region14: #{tpu_custom_call.1} parent=1 // pred_check
      _
    $region15: #{tpu_custom_call.1} parent=1 // pred_check_branch
      %38 = sbr.rel (0) target = $region17
    $region16: #{tpu_custom_call.1} parent=1 // pred_region
      %39 = dma.done [#allocation6], 2176
    $region17: #{tpu_custom_call.1} parent=1 // pred_fallthru
      _
    %s40 = smul.u32 0, 136
    %s41 = ssub.s32 130, %s40
    %p42 = scmp.lt.s32.totalorder %s41, 136
    %s43 = scalar_select %p42, %s41, 136
    %v44 = vld [vmem:[#allocation2] sm:$0xff]
    %v45 = vld [vmem:[#allocation2 + $0x8] sm:$0xff]
    %v46 = vld [vmem:[#allocation2 + $0x10] sm:$0xff]
    %v47 = vld [vmem:[#allocation2 + $0x18] sm:$0xff]
    %v48 = vld [vmem:[#allocation2 + $0x20] sm:$0xff]
    %v49 = vld [vmem:[#allocation2 + $0x28] sm:$0xff]
    %v50 = vld [vmem:[#allocation2 + $0x30] sm:$0xff]
    %v51 = vld [vmem:[#allocation2 + $0x38] sm:$0xff]
    %v52 = vld [vmem:[#allocation2 + $0x40] sm:$0xff]
    %v53 = vld [vmem:[#allocation2 + $0x48] sm:$0xff]
    %v54 = vld [vmem:[#allocation2 + $0x50] sm:$0xff]
    %v55 = vld [vmem:[#allocation2 + $0x58] sm:$0xff]
    %v56 = vld [vmem:[#allocation2 + $0x60] sm:$0xff]
    %v57 = vld [vmem:[#allocation2 + $0x68] sm:$0xff]
    %v58 = vld [vmem:[#allocation2 + $0x70] sm:$0xff]
    %v59 = vld [vmem:[#allocation2 + $0x78] sm:$0xff]
    %v60 = vld [vmem:[#allocation2 + $0x80] sm:$0xff]
    %v61 = vld [vmem:[#allocation5] sm:$0xff]
    %v62 = vld [vmem:[#allocation5 + $0x8] sm:$0xff]
    %v63 = vld [vmem:[#allocation5 + $0x10] sm:$0xff]
    %v64 = vld [vmem:[#allocation5 + $0x18] sm:$0xff]
    %v65 = vld [vmem:[#allocation5 + $0x20] sm:$0xff]
    %v66 = vld [vmem:[#allocation5 + $0x28] sm:$0xff]
    %v67 = vld [vmem:[#allocation5 + $0x30] sm:$0xff]
    %v68 = vld [vmem:[#allocation5 + $0x38] sm:$0xff]
    %v69 = vld [vmem:[#allocation5 + $0x40] sm:$0xff]
    %v70 = vld [vmem:[#allocation5 + $0x48] sm:$0xff]
    %v71 = vld [vmem:[#allocation5 + $0x50] sm:$0xff]
    %v72 = vld [vmem:[#allocation5 + $0x58] sm:$0xff]
    %v73 = vld [vmem:[#allocation5 + $0x60] sm:$0xff]
    %v74 = vld [vmem:[#allocation5 + $0x68] sm:$0xff]
    %v75 = vld [vmem:[#allocation5 + $0x70] sm:$0xff]
    %v76 = vld [vmem:[#allocation5 + $0x78] sm:$0xff]
    %v77 = vld [vmem:[#allocation5 + $0x80] sm:$0xff]
    %v78 = vadd.f32 %v44, 0.0
    %v79 = vadd.f32 %v45, 0.0
    %v80 = vadd.f32 %v46, 0.0
    %v81 = vadd.f32 %v47, 0.0
    %v82 = vadd.f32 %v48, 0.0
    %v83 = vadd.f32 %v49, 0.0
    %v84 = vadd.f32 %v50, 0.0
    %v85 = vadd.f32 %v51, 0.0
    %v86 = vadd.f32 %v52, 0.0
    %v87 = vadd.f32 %v53, 0.0
    %v88 = vadd.f32 %v54, 0.0
    %v89 = vadd.f32 %v55, 0.0
    %v90 = vadd.f32 %v56, 0.0
    %v91 = vadd.f32 %v57, 0.0
    %v92 = vadd.f32 %v58, 0.0
    %v93 = vadd.f32 %v59, 0.0
    %v94 = vadd.f32 %v60, 0.0
    %v95 = vlog2.pop %v78
    %v96 = vmul.f32 %v95, 0.6931472
    %v97 = vlog2.pop %v79
    %v98 = vmul.f32 %v97, 0.6931472
    %v99 = vlog2.pop %v80
    %v100 = vmul.f32 %v99, 0.6931472
    %v101 = vlog2.pop %v81
    %v102 = vmul.f32 %v101, 0.6931472
    %v103 = vlog2.pop %v82
    %v104 = vmul.f32 %v103, 0.6931472
    %v105 = vlog2.pop %v83
    %v106 = vmul.f32 %v105, 0.6931472
    %v107 = vlog2.pop %v84
    %v108 = vmul.f32 %v107, 0.6931472
    %v109 = vlog2.pop %v85
    %v110 = vmul.f32 %v109, 0.6931472
    %v111 = vlog2.pop %v86
    %v112 = vmul.f32 %v111, 0.6931472
    %v113 = vlog2.pop %v87
    %v114 = vmul.f32 %v113, 0.6931472
    %v115 = vlog2.pop %v88
    %v116 = vmul.f32 %v115, 0.6931472
    %v117 = vlog2.pop %v89
    %v118 = vmul.f32 %v117, 0.6931472
    %v119 = vlog2.pop %v90
    %v120 = vmul.f32 %v119, 0.6931472
    %v121 = vlog2.pop %v91
    %v122 = vmul.f32 %v121, 0.6931472
    %v123 = vlog2.pop %v92
    %v124 = vmul.f32 %v123, 0.6931472
    %v125 = vlog2.pop %v93
    %v126 = vmul.f32 %v125, 0.6931472
    %v127 = vlog2.pop %v94
    %v128 = vmul.f32 %v127, 0.6931472
    %v129 = vadd.f32 %v61, 0.0
    %v130 = vadd.f32 %v62, 0.0
    %v131 = vadd.f32 %v63, 0.0
    %v132 = vadd.f32 %v64, 0.0
    %v133 = vadd.f32 %v65, 0.0
    %v134 = vadd.f32 %v66, 0.0
    %v135 = vadd.f32 %v67, 0.0
    %v136 = vadd.f32 %v68, 0.0
    %v137 = vadd.f32 %v69, 0.0
    %v138 = vadd.f32 %v70, 0.0
    %v139 = vadd.f32 %v71, 0.0
    %v140 = vadd.f32 %v72, 0.0
    %v141 = vadd.f32 %v73, 0.0
    %v142 = vadd.f32 %v74, 0.0
    %v143 = vadd.f32 %v75, 0.0
    %v144 = vadd.f32 %v76, 0.0
    %v145 = vadd.f32 %v77, 0.0
    %v146 = vlog2.pop %v129
    %v147 = vmul.f32 %v146, 0.6931472
    %v148 = vlog2.pop %v130
    %v149 = vmul.f32 %v148, 0.6931472
    %v150 = vlog2.pop %v131
    %v151 = vmul.f32 %v150, 0.6931472
    %v152 = vlog2.pop %v132
    %v153 = vmul.f32 %v152, 0.6931472
    %v154 = vlog2.pop %v133
    %v155 = vmul.f32 %v154, 0.6931472
    %v156 = vlog2.pop %v134
    %v157 = vmul.f32 %v156, 0.6931472
    %v158 = vlog2.pop %v135
    %v159 = vmul.f32 %v158, 0.6931472
    %v160 = vlog2.pop %v136
    %v161 = vmul.f32 %v160, 0.6931472
    %v162 = vlog2.pop %v137
    %v163 = vmul.f32 %v162, 0.6931472
    %v164 = vlog2.pop %v138
    %v165 = vmul.f32 %v164, 0.6931472
    %v166 = vlog2.pop %v139
    %v167 = vmul.f32 %v166, 0.6931472
    %v168 = vlog2.pop %v140
    %v169 = vmul.f32 %v168, 0.6931472
    %v170 = vlog2.pop %v141
    %v171 = vmul.f32 %v170, 0.6931472
    %v172 = vlog2.pop %v142
    %v173 = vmul.f32 %v172, 0.6931472
    %v174 = vlog2.pop %v143
    %v175 = vmul.f32 %v174, 0.6931472
    %v176 = vlog2.pop %v144
    %v177 = vmul.f32 %v176, 0.6931472
    %v178 = vlog2.pop %v145
    %v179 = vmul.f32 %v178, 0.6931472
    %v180 = vsub.f32 %v96, %v147
    %v181 = vsub.f32 %v98, %v149
    %v182 = vsub.f32 %v100, %v151
    %v183 = vsub.f32 %v102, %v153
    %v184 = vsub.f32 %v104, %v155
    %v185 = vsub.f32 %v106, %v157
    %v186 = vsub.f32 %v108, %v159
    %v187 = vsub.f32 %v110, %v161
    %v188 = vsub.f32 %v112, %v163
    %v189 = vsub.f32 %v114, %v165
    %v190 = vsub.f32 %v116, %v167
    %v191 = vsub.f32 %v118, %v169
    %v192 = vsub.f32 %v120, %v171
    %v193 = vsub.f32 %v122, %v173
    %v194 = vsub.f32 %v124, %v175
    %v195 = vsub.f32 %v126, %v177
    %v196 = vsub.f32 %v128, %v179
    %v197 = vand.u32 2147483647, %v180
    %v198 = vand.u32 2147483647, %v181
    %v199 = vand.u32 2147483647, %v182
    %v200 = vand.u32 2147483647, %v183
    %v201 = vand.u32 2147483647, %v184
    %v202 = vand.u32 2147483647, %v185
    %v203 = vand.u32 2147483647, %v186
    %v204 = vand.u32 2147483647, %v187
    %v205 = vand.u32 2147483647, %v188
    %v206 = vand.u32 2147483647, %v189
    %v207 = vand.u32 2147483647, %v190
    %v208 = vand.u32 2147483647, %v191
    %v209 = vand.u32 2147483647, %v192
    %v210 = vand.u32 2147483647, %v193
    %v211 = vand.u32 2147483647, %v194
    %v212 = vand.u32 2147483647, %v195
    %v213 = vand.u32 2147483647, %v196
    %v214 = vlaneseq
    %v215 = vshrl.u32 %v214, 7
    %v216 = vadd.s32 %v215, 8
    %v217 = vadd.s32 %v215, 16
    %v218 = vadd.s32 %v215, 24
    %v219 = vadd.s32 %v215, 32
    %v220 = vadd.s32 %v215, 40
    %v221 = vadd.s32 %v215, 48
    %v222 = vadd.s32 %v215, 56
    %v223 = vadd.s32 %v215, 64
    %v224 = vadd.s32 %v215, 72
    %v225 = vadd.s32 %v215, 80
    %v226 = vadd.s32 %v215, 88
    %v227 = vadd.s32 %v215, 96
    %v228 = vadd.s32 %v215, 104
    %v229 = vadd.s32 %v215, 112
    %v230 = vadd.s32 %v215, 120
    %v231 = vadd.s32 %v215, 128
    %v232 = vstv 0
    %v233 = vadd.s32 %v232, %v215
    %v234 = vadd.s32 %v232, %v216
    %v235 = vadd.s32 %v232, %v217
    %v236 = vadd.s32 %v232, %v218
    %v237 = vadd.s32 %v232, %v219
    %v238 = vadd.s32 %v232, %v220
    %v239 = vadd.s32 %v232, %v221
    %v240 = vadd.s32 %v232, %v222
    %v241 = vadd.s32 %v232, %v223
    %v242 = vadd.s32 %v232, %v224
    %v243 = vadd.s32 %v232, %v225
    %v244 = vadd.s32 %v232, %v226
    %v245 = vadd.s32 %v232, %v227
    %v246 = vadd.s32 %v232, %v228
    %v247 = vadd.s32 %v232, %v229
    %v248 = vadd.s32 %v232, %v230
    %v249 = vadd.s32 %v232, %v231
    %v250 = vstv %s43
    %vm251 = vcmp.lt.s32.totalorder %v233, %v250
    %vm252 = vcmp.lt.s32.totalorder %v234, %v250
    %vm253 = vcmp.lt.s32.totalorder %v235, %v250
    %vm254 = vcmp.lt.s32.totalorder %v236, %v250
    %vm255 = vcmp.lt.s32.totalorder %v237, %v250
    %vm256 = vcmp.lt.s32.totalorder %v238, %v250
    %vm257 = vcmp.lt.s32.totalorder %v239, %v250
    %vm258 = vcmp.lt.s32.totalorder %v240, %v250
    %vm259 = vcmp.lt.s32.totalorder %v241, %v250
    %vm260 = vcmp.lt.s32.totalorder %v242, %v250
    %vm261 = vcmp.lt.s32.totalorder %v243, %v250
    %vm262 = vcmp.lt.s32.totalorder %v244, %v250
    %vm263 = vcmp.lt.s32.totalorder %v245, %v250
    %vm264 = vcmp.lt.s32.totalorder %v246, %v250
    %vm265 = vcmp.lt.s32.totalorder %v247, %v250
    %vm266 = vcmp.lt.s32.totalorder %v248, %v250
    %vm267 = vcmp.lt.s32.totalorder %v249, %v250
    %v268 = vsel %vm251, %v197, 0.0
    %v269 = vsel %vm252, %v198, 0.0
    %v270 = vsel %vm253, %v199, 0.0
    %v271 = vsel %vm254, %v200, 0.0
    %v272 = vsel %vm255, %v201, 0.0
    %v273 = vsel %vm256, %v202, 0.0
    %v274 = vsel %vm257, %v203, 0.0
    %v275 = vsel %vm258, %v204, 0.0
    %v276 = vsel %vm259, %v205, 0.0
    %v277 = vsel %vm260, %v206, 0.0
    %v278 = vsel %vm261, %v207, 0.0
    %v279 = vsel %vm262, %v208, 0.0
    %v280 = vsel %vm263, %v209, 0.0
    %v281 = vsel %vm264, %v210, 0.0
    %v282 = vsel %vm265, %v211, 0.0
    %v283 = vsel %vm266, %v212, 0.0
    %v284 = vsel %vm267, %v213, 0.0
    %v285 = vadd.f32 %v268, %v269
    %v286 = vadd.f32 %v285, %v270
    %v287 = vadd.f32 %v286, %v271
    %v288 = vadd.f32 %v287, %v272
    %v289 = vadd.f32 %v288, %v273
    %v290 = vadd.f32 %v289, %v274
    %v291 = vadd.f32 %v290, %v275
    %v292 = vadd.f32 %v291, %v276
    %v293 = vadd.f32 %v292, %v277
    %v294 = vadd.f32 %v293, %v278
    %v295 = vadd.f32 %v294, %v279
    %v296 = vadd.f32 %v295, %v280
    %v297 = vadd.f32 %v296, %v281
    %v298 = vadd.f32 %v297, %v282
    %v299 = vadd.f32 %v298, %v283
    %v300 = vadd.f32 %v299, %v284
    %v301 = vadd.f32 %v300, 0.0
    %302 = vst [vmem:[#allocation7] sm:$0xff] %v301
    // Predicated region
    $region18: #{tpu_custom_call.1} parent=1 // pred_check
      _
    $region19: #{tpu_custom_call.1} parent=1 // pred_check_branch
      %304 = sbr.rel (0) target = $region21
    $region20: #{tpu_custom_call.1} parent=1 // pred_region
      %s306 = ssub.s32 128, 128
      %307 = vsyncadd [#allocation4], %s306
      %s309 = sshll.u32 [#allocation7], 4
      %s310 = int_to_ptr.vmem [resolvable:$true] %s309
      %312 = dma.vmem_to_hbm [thread:$0]  %s310, 128, %s2, [#allocation4]
    $region21: #{tpu_custom_call.1} parent=1 // pred_fallthru
      _
    // Predicated region
    $region22: #{tpu_custom_call.1} parent=1 // pred_check
      _
    $region23: #{tpu_custom_call.1} parent=1 // pred_check_branch
      %314 = sbr.rel (0) target = $region25
    $region24: #{tpu_custom_call.1} parent=1 // pred_region
      %315 = dma.done [#allocation4], 128
    $region25: #{tpu_custom_call.1} parent=1 // pred_fallthru
      _
    %316 = vsyncpa [#allocation3], 1
    %317 = vsyncpa [#allocation6], 1
    %318 = vsyncpa [#allocation4], 1

</llo_original>
